<compile_context>
chip_gen: v5e
topology: v5e:2x2
jax: 0.10.0
libtpu: 0.0.40
codegen_flags: <defaults>
</compile_context>

<pallas_src>
import math

import numpy as np

import jax
import jax.numpy as jnp
from jax import lax
from jax.experimental import pallas as pl
from jax.experimental.pallas import tpu as pltpu

LANES = 128


def _round_up(x, m):
    return (x + m - 1) // m * m


# --------------- fused adversarial + feature-matching reduction ---------------

def _fused_reduce_kernel(a_ref, b_ref, w_ref, o_ref):
    # a: generated feature rows, b: target feature rows, both (tile, 128) f32.
    # w: (tile, 3) f32 = [w_adv, w_fm, valid_lane_count].
    a = a_ref[...]
    b = b_ref[...]
    w = w_ref[...]
    lane = lax.broadcasted_iota(jnp.int32, a.shape, 1).astype(jnp.float32)
    in_range = lane < w[:, 2:3]               # mask padded lanes (adv path only)
    d_adv = a - 1.0                           # adversarial target is ones
    adv = jnp.sum(w[:, 0:1] * jnp.where(in_range, d_adv * d_adv, 0.0),
                  axis=0, keepdims=True)                        # (1, 128)
    fm = jnp.sum(w[:, 1:2] * jnp.abs(a - b), axis=0, keepdims=True)   # (1, 128)
    o_ref[...] = jnp.concatenate([adv, fm], axis=-1).reshape(1, 1, 2 * LANES)


def _pack_rows(x):
    """Flatten to f32, pad to a multiple of 128 lanes -> (rows, 128), numel, rows."""
    flat = x.reshape(-1).astype(jnp.float32)
    n = flat.size
    rows = max(1, _round_up(n, LANES) // LANES)
    flat = jnp.pad(flat, (0, rows * LANES - n))
    return flat.reshape(rows, LANES), n, rows


def fused_adv_fm_loss(segments, *, row_tile=2048):
    """segments: list of (gen, tgt, is_adv, is_fm).

    Returns (adv_loss, fm_loss):
      adv_loss = sum over adv segments of mean((gen - 1)^2)
      fm_loss  = sum over fm  segments of mean(|gen - tgt|)
    Everything is packed into one lane-dense (rows, 128) stream; per-row
    weights route rows to the adv and/or fm accumulator, so the whole loss is
    a single weighted segmented reduction in one pallas_call.
    """
    a_rows, b_rows, w_np = [], [], []
    for gen, tgt, is_adv, is_fm in segments:
        a, n, r = _pack_rows(gen)
        b, _, _ = _pack_rows(tgt)
        a_rows.append(a)
        b_rows.append(b)
        w = np.zeros((r, 3), np.float32)              # constant data -> numpy
        w[:, 0] = (1.0 / n) if is_adv else 0.0
        w[:, 1] = (1.0 / n) if is_fm else 0.0
        w[:, 2] = float(LANES)
        w[r - 1, 2] = float(n - (r - 1) * LANES)      # valid lanes in last row
        w_np.append(w)

    A = jnp.concatenate(a_rows, axis=0)
    Bm = jnp.concatenate(b_rows, axis=0)
    W = jnp.asarray(np.concatenate(w_np, axis=0))

    n_rows = A.shape[0]
    # Big tiles amortize the ~0.35us/step pipeline overhead, but keep >= 2 grid
    # steps when possible so the "parallel" axis shards across v7x's 2 TCs.
    if n_rows <= 8:
        tile = 8
    else:
        tile = min(row_tile, _round_up(-(-n_rows // 2), 8))
    padded = _round_up(n_rows, tile)
    if padded != n_rows:
        A = jnp.pad(A, ((0, padded - n_rows), (0, 0)))
        Bm = jnp.pad(Bm, ((0, padded - n_rows), (0, 0)))
        W = jnp.pad(W, ((0, padded - n_rows), (0, 0)))
    num_tiles = padded // tile

    n_elem = padded * LANES
    cost = pl.CostEstimate(
        flops=9 * n_elem,
        transcendentals=0,
        bytes_accessed=4 * (2 * n_elem + 3 * padded + num_tiles * 2 * LANES))

    # VMEM: ~2 * 2 * tile*128*4B ~= 4 MiB at tile=2048 -> well under scoped defaults.
    out = pl.pallas_call(
        _fused_reduce_kernel,
        out_shape=jax.ShapeDtypeStruct((num_tiles, 1, 2 * LANES), jnp.float32),
        grid=(num_tiles,),
        in_specs=[pl.BlockSpec((tile, LANES), lambda i: (i, 0)),
                  pl.BlockSpec((tile, LANES), lambda i: (i, 0)),
                  pl.BlockSpec((tile, 3), lambda i: (i, 0))],
        out_specs=pl.BlockSpec((1, 1, 2 * LANES), lambda i: (i, 0, 0)),
        compiler_params=pltpu.CompilerParams(
            dimension_semantics=("parallel",),
            # Let XLA fuse the wrapper-side pad/reshape/concat packing directly
            # into the kernel operands (avoids an extra HBM write+read pass).
            allow_input_fusion=[True, True, True]),
        cost_estimate=cost,
    )(A, Bm, W)

    adv_loss = jnp.sum(out[:, 0, :LANES])
    fm_loss = jnp.sum(out[:, 0, LANES:])
    return adv_loss, fm_loss


# ---------------------------- mel-spectrogram pieces ----------------------------

def make_dft_bases(n_fft):
    # Hann window (periodic, as torch.hann_window) folded into the DFT bases.
    n = jnp.arange(n_fft, dtype=jnp.float32)
    k = jnp.arange(n_fft // 2 + 1, dtype=jnp.float32)
    window = 0.5 - 0.5 * jnp.cos(2.0 * jnp.pi * n / n_fft)
    ang = 2.0 * jnp.pi * n[:, None] * k[None, :] / n_fft
    cos_b = (window[:, None] * jnp.cos(ang)).astype(jnp.float32)   # (n_fft, n_freq)
    sin_b = (-window[:, None] * jnp.sin(ang)).astype(jnp.float32)  # (n_fft, n_freq)
    return cos_b, sin_b


def make_mel_filterbank(sr, n_fft, n_mels, f_min=0.0, f_max=None):
    # Deterministic HTK-scale triangular mel filterbank (norm=None).
    if f_max is None:
        f_max = sr / 2.0
    n_freq = n_fft // 2 + 1

    def hz_to_mel(f):
        return 2595.0 * math.log10(1.0 + f / 700.0)

    m_pts = jnp.linspace(hz_to_mel(f_min), hz_to_mel(f_max), n_mels + 2)
    f_pts = 700.0 * (10.0 ** (m_pts / 2595.0) - 1.0)
    freqs = jnp.linspace(0.0, sr / 2.0, n_freq)
    f_lo = f_pts[:-2][None, :]
    f_ce = f_pts[1:-1][None, :]
    f_hi = f_pts[2:][None, :]
    up = (freqs[:, None] - f_lo) / (f_ce - f_lo)
    down = (f_hi - freqs[:, None]) / (f_hi - f_ce)
    fb = jnp.maximum(0.0, jnp.minimum(up, down))
    return fb.astype(jnp.float32)   # (n_freq, n_mels)


def mel_spectrogram_l1(audio, target_spec, *, sr=16000, n_fft=128, hop=64,
                       n_mels=20, target_rows=256):
    """Fused log-mel spectrogram of `audio` + L1 against `target_spec` (B, n_mels, F)."""
    # TODO(synk): MelSpectrogramConfig was not provided; this assumes a standard
    # Hann-window STFT (center=True, reflect pad), power=2, HTK mel filterbank,
    # and log(clamp(., 1e-5)) as in common HiFi-GAN setups.
    B, T = audio.shape
    assert n_fft % hop == 0, "hop must divide n_fft for in-kernel framing"
    assert hop % 8 == 0
    step = n_fft // hop
    pad = n_fft // 2

    x = jnp.pad(audio.astype(jnp.float32), ((0, 0), (pad, pad)), mode="reflect")
    L = x.shape[1]
    F = 1 + (L - n_fft) // hop              # frame count (== 1 + T // hop)
    R = F + step - 1                        # hop-rows needed to cover all frames
    x_rows = x[:, :R * hop].reshape(B, R, hop)

    R_pad = _round_up(R, 8)                 # sublane-aligned per-batch row block
    # Batch several waveforms per grid step so the DFT matmul sees a real M
    # dimension, but keep >= 2 grid steps when B allows (v7x megacore).
    Bb = min(B, max(1, -(-target_rows // R_pad)))
    if B > 1 and Bb >= B:
        Bb = -(-B // 2)
    B_pad = _round_up(B, Bb)
    num_steps = B_pad // Bb
    M = Bb * R_pad

    x_rows = jnp.pad(x_rows, ((0, B_pad - B), (0, R_pad - R), (0, 0)))

    n_freq = n_fft // 2 + 1
    nf_pad = _round_up(n_freq, LANES)
    nm_pad = _round_up(n_mels, LANES)

    cos_b, sin_b = make_dft_bases(n_fft)
    basis = jnp.concatenate(
        [jnp.pad(cos_b, ((0, 0), (0, nf_pad - n_freq))),
         jnp.pad(sin_b, ((0, 0), (0, nf_pad - n_freq)))],
        axis=1).astype(jnp.bfloat16)                       # (n_fft, 2*nf_pad) bf16
    mel_fb = jnp.pad(make_mel_filterbank(sr, n_fft, n_mels),
                     ((0, nf_pad - n_freq), (0, nm_pad - n_mels))
                     ).astype(jnp.bfloat16)                # (nf_pad, nm_pad) bf16

    assert target_spec.shape == (B, n_mels, F), target_spec.shape
    tgt = jnp.pad(target_spec.astype(jnp.float32).transpose(0, 2, 1),
                  ((0, B_pad - B), (0, R_pad - F), (0, nm_pad - n_mels)))

    def kernel(xr_ref, basis_ref, fb_ref, tgt_ref, o_ref):
        pid = pl.program_id(0)
        # (Bb, R_pad, hop) -> (Bb*R_pad, hop); layout-preserving (R_pad % 8 == 0).
        xr = xr_ref[...].reshape(M, hop).astype(jnp.bfloat16)
        # Windowed DFT: `step` accumulated MXU matmuls of the FULL aligned row
        # block against hop-row slices of the basis; frame overlap realized by
        # XLU sublane rolls of the f32 results (no unaligned lane-concat framing).
        spec = jnp.zeros((M, 2 * nf_pad), jnp.float32)
        for i in range(step):
            y = jnp.dot(xr, basis_ref[pl.ds(i * hop, hop), :],
                        preferred_element_type=jnp.float32)    # (M, 2*nf_pad) f32
            if i:
                y = pltpu.roll(y, shift=M - i, axis=0)          # y[r] <- y[r + i]
            spec = spec + y
        re = spec[:, :nf_pad]
        im = spec[:, nf_pad:]
        power = re * re + im * im                               # f32 on VPU
        mel = jnp.dot(power.astype(jnp.bfloat16), fb_ref[...],
                      preferred_element_type=jnp.float32)       # (M, nm_pad)
        logmel = jnp.log(jnp.maximum(mel, 1e-5)).reshape(Bb, R_pad, nm_pad)
        diff = jnp.abs(logmel - tgt_ref[...])
        bidx = lax.broadcasted_iota(jnp.int32, diff.shape, 0)
        fidx = lax.broadcasted_iota(jnp.int32, diff.shape, 1)
        midx = lax.broadcasted_iota(jnp.int32, diff.shape, 2)
        valid = ((pid * Bb + bidx) < B) & (fidx < F) & (midx < n_mels)
        diff = jnp.where(valid, diff, 0.0)
        o_ref[...] = jnp.sum(diff, axis=(0, 1)).reshape(1, 1, nm_pad)

    dft_flops = 2 * num_steps * step * M * hop * (2 * nf_pad)
    mel_flops = 2 * num_steps * M * nf_pad * nm_pad
    cost = pl.CostEstimate(
        flops=dft_flops + mel_flops + 8 * num_steps * M * nf_pad,
        transcendentals=num_steps * M * nm_pad,
        bytes_accessed=(4 * B_pad * R_pad * hop + 2 * n_fft * 2 * nf_pad
                        + 2 * nf_pad * nm_pad + 4 * B_pad * R_pad * nm_pad
                        + 4 * num_steps * nm_pad))

    # VMEM footprint (basis + fb + per-step blocks) is well under scoped defaults
    # even on v7x (64 MiB physical / 32 MiB scoped); no explicit limit needed.
    out = pl.pallas_call(
        kernel,
        out_shape=jax.ShapeDtypeStruct((num_steps, 1, nm_pad), jnp.float32),
        grid=(num_steps,),
        in_specs=[pl.BlockSpec((Bb, R_pad, hop), lambda s: (s, 0, 0)),
                  pl.BlockSpec((n_fft, 2 * nf_pad), lambda s: (0, 0)),
                  pl.BlockSpec((nf_pad, nm_pad), lambda s: (0, 0)),
                  pl.BlockSpec((Bb, R_pad, nm_pad), lambda s: (s, 0, 0))],
        out_specs=pl.BlockSpec((1, 1, nm_pad), lambda s: (s, 0, 0)),
        compiler_params=pltpu.CompilerParams(
            dimension_semantics=("parallel",)),
        cost_estimate=cost,
    )(x_rows, basis, mel_fb, tgt)

    return jnp.sum(out) / jnp.float32(B * n_mels * F)


# -------------------------------- GeneratorLoss --------------------------------

def generator_loss(msd_target_features, mpd_target_features,
                   msd_generated_features, mpd_generated_features,
                   output_audio, spectrogram,
                   alpha_fm=2.0, alpha_mel=45.0, melspec_kwargs=None):
    melspec_kwargs = melspec_kwargs or {}

    # Pack every (generated, target) feature-map pair once.  The generated LAST
    # feature map of each discriminator doubles as the adversarial term (MSE vs
    # ones), so it is streamed from HBM exactly once.
    segments = []
    for d_t, d_g in zip(msd_target_features, msd_generated_features):
        for li, (f_t, f_g) in enumerate(zip(d_t, d_g)):
            segments.append((f_g, f_t, li == len(d_g) - 1, True))
        if len(d_t) < len(d_g):           # adv term always uses generated[-1]
            segments.append((d_g[-1], d_g[-1], True, False))
    for d_t, d_g in zip(mpd_target_features, mpd_generated_features):
        for li, (f_t, f_g) in enumerate(zip(d_t, d_g)):
            segments.append((f_g, f_t, li == len(d_g) - 1, True))
        if len(d_t) < len(d_g):
            segments.append((d_g[-1], d_g[-1], True, False))

    adv_loss, fm_total = fused_adv_fm_loss(segments)
    melspec_l = mel_spectrogram_l1(output_audio, spectrogram, **melspec_kwargs)

    loss = adv_loss + alpha_fm * fm_total + alpha_mel * melspec_l
    return {"loss": loss, "adv_loss": adv_loss,
            "melspec_loss": melspec_l, "fm_loss": fm_total}


# ------------------------------------ main ------------------------------------

if __name__ == "__main__":
    key = jax.random.PRNGKey(0)
    B = 2
    T = 1024
    n_fft, hop, n_mels, sr = 128, 64, 20, 16000

    keys = jax.random.split(key, 32)
    _ki = iter(keys)

    def rnd(shape):
        return jax.random.normal(next(_ki), shape, dtype=jnp.float32)

    # MSD: 2 discriminators x 3 feature maps, each (B, C, T')
    msd_shapes = [[(B, 8, 256), (B, 16, 128), (B, 1, 64)],
                  [(B, 8, 128), (B, 16, 64), (B, 1, 32)]]
    # MPD: 2 discriminators x 3 feature maps, each (B, C, H, W)
    mpd_shapes = [[(B, 8, 32, 2), (B, 16, 16, 2), (B, 1, 8, 2)],
                  [(B, 8, 32, 3), (B, 16, 16, 3), (B, 1, 8, 3)]]

    msd_target = [[rnd(s) for s in d] for d in msd_shapes]
    msd_gen = [[rnd(s) for s in d] for d in msd_shapes]
    mpd_target = [[rnd(s) for s in d] for d in mpd_shapes]
    mpd_gen = [[rnd(s) for s in d] for d in mpd_shapes]

    output_audio = 0.1 * rnd((B, T))                 # generator output waveform
    num_frames = T // hop + 1
    spectrogram = rnd((B, n_mels, num_frames))       # target (ground-truth) mel

    out = generator_loss(
        msd_target, mpd_target, msd_gen, mpd_gen,
        output_audio, spectrogram,
        alpha_fm=2.0, alpha_mel=45.0,
        melspec_kwargs=dict(sr=sr, n_fft=n_fft, hop=hop, n_mels=n_mels),
    )
    jax.block_until_ready(out["loss"])
    print("KERNEL_OK")
</pallas_src>

<mosaic_0001>
module attributes {stable_mosaic.version = 11 : i64} {
  func.func @_fused_reduce_kernel(%arg0: i32, %arg1: memref<72x128xf32, #tpu.memory_space<vmem>>, %arg2: memref<72x128xf32, #tpu.memory_space<vmem>>, %arg3: memref<72x3xf32, #tpu.memory_space<vmem>>, %arg4: memref<1x1x256xf32, #tpu.memory_space<vmem>>) attributes {dimension_semantics = [#tpu.dimension_semantics<parallel>], iteration_bounds = array<i64: 2>, scalar_prefetch = 0 : i64, scratch_operands = 0 : i64, tpu.core_type = #tpu.core_type<tc>, window_params = [{transform_indices = @transform_0, window_bounds = array<i64: 72, 128>}, {transform_indices = @transform_1, window_bounds = array<i64: 72, 128>}, {transform_indices = @transform_2, window_bounds = array<i64: 72, 3>}, {transform_indices = @transform_3, window_bounds = array<i64: 1, 1, 256>}]} {
    %c0 = arith.constant 0 : index
    %c0_0 = arith.constant 0 : index
    %0 = vector.load %arg1[%c0, %c0_0] : memref<72x128xf32, #tpu.memory_space<vmem>>, vector<72x128xf32>
    %c0_1 = arith.constant 0 : index
    %c0_2 = arith.constant 0 : index
    %1 = vector.load %arg2[%c0_1, %c0_2] : memref<72x128xf32, #tpu.memory_space<vmem>>, vector<72x128xf32>
    %c0_3 = arith.constant 0 : index
    %c0_4 = arith.constant 0 : index
    %2 = vector.load %arg3[%c0_3, %c0_4] : memref<72x3xf32, #tpu.memory_space<vmem>>, vector<72x3xf32>
    %3 = tpu.iota {dimensions = array<i32: 1>} : vector<72x128xi32>
    %4 = arith.sitofp %3 : vector<72x128xi32> to vector<72x128xf32>
    %5 = vector.extract_strided_slice %2 {offsets = [0, 2], sizes = [72, 1], strides = [1, 1]} : vector<72x3xf32> to vector<72x1xf32>
    %6 = vector.broadcast %5 : vector<72x1xf32> to vector<72x128xf32>
    %7 = arith.cmpf olt, %4, %6 : vector<72x128xf32>
    %cst = arith.constant 1.000000e+00 : f32
    %8 = vector.broadcast %cst : f32 to vector<72x128xf32>
    %9 = arith.subf %0, %8 : vector<72x128xf32>
    %10 = vector.extract_strided_slice %2 {offsets = [0, 0], sizes = [72, 1], strides = [1, 1]} : vector<72x3xf32> to vector<72x1xf32>
    %11 = arith.mulf %9, %9 : vector<72x128xf32>
    %cst_5 = arith.constant 0.000000e+00 : f32
    %12 = vector.broadcast %cst_5 : f32 to vector<72x128xf32>
    %13 = arith.select %7, %11, %12 : vector<72x128xi1>, vector<72x128xf32>
    %14 = vector.broadcast %10 : vector<72x1xf32> to vector<72x128xf32>
    %15 = arith.mulf %14, %13 : vector<72x128xf32>
    %cst_6 = arith.constant dense<0.000000e+00> : vector<128xf32>
    %16 = vector.multi_reduction <add>, %15, %cst_6 [0] : vector<72x128xf32> to vector<128xf32>
    %17 = vector.shape_cast %16 : vector<128xf32> to vector<1x128xf32>
    %18 = vector.extract_strided_slice %2 {offsets = [0, 1], sizes = [72, 1], strides = [1, 1]} : vector<72x3xf32> to vector<72x1xf32>
    %19 = arith.subf %0, %1 : vector<72x128xf32>
    %20 = math.absf %19 : vector<72x128xf32>
    %21 = vector.broadcast %18 : vector<72x1xf32> to vector<72x128xf32>
    %22 = arith.mulf %21, %20 : vector<72x128xf32>
    %cst_7 = arith.constant dense<0.000000e+00> : vector<128xf32>
    %23 = vector.multi_reduction <add>, %22, %cst_7 [0] : vector<72x128xf32> to vector<128xf32>
    %24 = vector.shape_cast %23 : vector<128xf32> to vector<1x128xf32>
    %25 = tpu.concatenate %17, %24 in 1 : vector<1x128xf32>, vector<1x128xf32> -> vector<1x256xf32>
    %26 = vector.shape_cast %25 : vector<1x256xf32> to vector<1x1x256xf32>
    %c0_8 = arith.constant 0 : index
    %c0_9 = arith.constant 0 : index
    %c0_10 = arith.constant 0 : index
    %27 = vector.load %arg4[%c0_8, %c0_9, %c0_10] : memref<1x1x256xf32, #tpu.memory_space<vmem>>, vector<1x1x256xf32>
    tpu.vector_store %arg4[%c0_8, %c0_9, %c0_10], %26 {strides = array<i32>} : memref<1x1x256xf32, #tpu.memory_space<vmem>>, vector<1x1x256xf32>,
    return
  }
  func.func @transform_0(%arg0: i32) -> (i32, i32) {
    %c0_i32 = arith.constant 0 : i32
    %c0_i32_0 = arith.constant 0 : i32
    return %arg0, %c0_i32 : i32, i32
  }
  func.func @transform_1(%arg0: i32) -> (i32, i32) {
    %c0_i32 = arith.constant 0 : i32
    %c0_i32_0 = arith.constant 0 : i32
    return %arg0, %c0_i32 : i32, i32
  }
  func.func @transform_2(%arg0: i32) -> (i32, i32) {
    %c0_i32 = arith.constant 0 : i32
    %c0_i32_0 = arith.constant 0 : i32
    return %arg0, %c0_i32 : i32, i32
  }
  func.func @transform_3(%arg0: i32) -> (i32, i32, i32) {
    %c0_i32 = arith.constant 0 : i32
    %c0_i32_0 = arith.constant 0 : i32
    %c0_i32_1 = arith.constant 0 : i32
    return %arg0, %c0_i32, %c0_i32_0 : i32, i32, i32
  }
}

</mosaic_0001>

<llo_original>
// kernel: tpu_custom_call.1
$region0: #{tpu_custom_call.1}
  #allocation0 [shape = 'u32[]', space=smem, size = 0x4, offset = 0x4, fixed_abs, tag = 'smem constant byte address 0x4 - core index']
  #allocation1 [shape = 'u32[72,128]{1,0:T(1,128)}', space=vmem, size = 0x9000, scoped, tag = 'internal scratch']
  %s0 = inlined_call_operand.vmem [shape: f32[144,128], index: 0, kind: input, shape index: {}]
  %s1 = inlined_call_operand.hbm [shape: f32[144,128], index: 1, kind: input, shape index: {}]
  %s2 = inlined_call_operand.vmem [shape: f32[144,3], index: 2, kind: input, shape index: {}]
  %s3 = inlined_call_operand.hbm [shape: f32[2,1,256], index: 3, kind: output, shape index: {}]
  %s4 = sld [smem:[#allocation0]]
  $region49: #{tpu_custom_call.1} parent=0
    _
  %s6 = ssub.s32 1, %s4
  %s7 = scalar_select 0, %s6, %s4
  $region1: #{tpu_custom_call.1} parent=0
    #allocation2 [shape = 'u8[73728]{0}', space=vmem, size = 0x12000, scoped, tag = 'input window, operand 1']
    #allocation3 [shape = 's32[2]{0}', space=sflag, size = 0x8, scoped, tag = 'scoped memory for tpu_custom_call.1']
    #allocation4 [shape = 's32[2]{0}', space=sflag, size = 0x8, scoped, tag = 'scoped memory for tpu_custom_call.1']
    #allocation5 [shape = 'u8[2048]{0}', space=vmem, size = 0x800, scoped, tag = 'output window, operand 0']
    %8 = vsyncpa [#allocation3], 0
    %s9 = scalar_lea.sflag [#allocation3], 1
    %10 = vsyncpa %s9, 0
    %11 = vsyncpa [#allocation4], 0
    %s12 = scalar_lea.sflag [#allocation4], 1
    %13 = vsyncpa %s12, 0
    loop: start=0, step=1, limit=4
    $region2: #{tpu_custom_call.1} parent=1 // loop_pre_header
      _
    $region3: #{tpu_custom_call.1} parent=1 // loop_header
      %s15 = sphi 0, %s19
      %p16 = scmp.ge.s32.totalorder %s15, 4
      %s25 = sphi 0, %s27
      %s28 = sphi 0, %s25
      %s29 = sphi 0, %s28
      %s45 = sphi 0, %s29
      %s51 = sphi 0, %s53
      %s54 = sphi 0, %s51
      %s55 = sphi 0, %s54
      %s71 = sphi 0, %s55
      %s77 = sphi 0, %s79
      %s80 = sphi 0, %s77
      %s81 = sphi 0, %s80
      %s97 = sphi 0, %s81
      %s103 = sphi 0, %s105
      %s106 = sphi 0, %s103
      %s107 = sphi 0, %s106
      %s123 = sphi 0, %s107
    $region4: #{tpu_custom_call.1} parent=1 // loop_header_branch
      %18 = sbr.rel (%p16) target = $region8
    $region5: #{tpu_custom_call.1} parent=1 // loop_body
      %s20 = ssub.s32 %s15, 1
      %s21 = ssub.s32 %s15, 2
      %s22 = sadd.s32 %s15, 1
      %s23 = ssub.s32 %s15, %s22
      %p24 = scmp.eq.s32.totalorder %s23, 0
      %s26 = sadd.s32 %s25, 1
      %s27 = scalar_select %p24, %s25, %s26
      %p30 = pneg %p24
      %p31 = scmp.eq.s32.totalorder %s15, 1
      %p32 = por %p30, %p31
      %p33 = scmp.ne.s32.totalorder %s25, %s28
      %p34 = scmp.eq.s32.totalorder %s15, 0
      %p35 = por %p33, %p34
      %p36 = scmp.ne.s32.totalorder %s25, %s28
      %p37 = scmp.eq.s32.totalorder %s20, 1
      %p38 = por %p36, %p37
      %p39 = scmp.ne.s32.totalorder %s28, %s29
      %p40 = scmp.eq.s32.totalorder %s20, 0
      %p41 = por %p39, %p40
      %p42 = scmp.ne.s32.totalorder %s28, %s29
      %p43 = scmp.eq.s32.totalorder %s21, 1
      %p44 = por %p42, %p43
      %p46 = scmp.ne.s32.totalorder %s29, %s45
      %p47 = scmp.eq.s32.totalorder %s21, 0
      %p48 = por %p46, %p47
      %s49 = ssub.s32 %s15, %s22
      %p50 = scmp.eq.s32.totalorder %s49, 0
      %s52 = sadd.s32 %s51, 1
      %s53 = scalar_select %p50, %s51, %s52
      %p56 = pneg %p50
      %p57 = scmp.eq.s32.totalorder %s15, 1
      %p58 = por %p56, %p57
      %p59 = scmp.ne.s32.totalorder %s51, %s54
      %p60 = scmp.eq.s32.totalorder %s15, 0
      %p61 = por %p59, %p60
      %p62 = scmp.ne.s32.totalorder %s51, %s54
      %p63 = scmp.eq.s32.totalorder %s20, 1
      %p64 = por %p62, %p63
      %p65 = scmp.ne.s32.totalorder %s54, %s55
      %p66 = scmp.eq.s32.totalorder %s20, 0
      %p67 = por %p65, %p66
      %p68 = scmp.ne.s32.totalorder %s54, %s55
      %p69 = scmp.eq.s32.totalorder %s21, 1
      %p70 = por %p68, %p69
      %p72 = scmp.ne.s32.totalorder %s55, %s71
      %p73 = scmp.eq.s32.totalorder %s21, 0
      %p74 = por %p72, %p73
      %s75 = ssub.s32 %s15, %s22
      %p76 = scmp.eq.s32.totalorder %s75, 0
      %s78 = sadd.s32 %s77, 1
      %s79 = scalar_select %p76, %s77, %s78
      %p82 = pneg %p76
      %p83 = scmp.eq.s32.totalorder %s15, 1
      %p84 = por %p82, %p83
      %p85 = scmp.ne.s32.totalorder %s77, %s80
      %p86 = scmp.eq.s32.totalorder %s15, 0
      %p87 = por %p85, %p86
      %p88 = scmp.ne.s32.totalorder %s77, %s80
      %p89 = scmp.eq.s32.totalorder %s20, 1
      %p90 = por %p88, %p89
      %p91 = scmp.ne.s32.totalorder %s80, %s81
      %p92 = scmp.eq.s32.totalorder %s20, 0
      %p93 = por %p91, %p92
      %p94 = scmp.ne.s32.totalorder %s80, %s81
      %p95 = scmp.eq.s32.totalorder %s21, 1
      %p96 = por %p94, %p95
      %p98 = scmp.ne.s32.totalorder %s81, %s97
      %p99 = scmp.eq.s32.totalorder %s21, 0
      %p100 = por %p98, %p99
      %s101 = ssub.s32 %s15, %s22
      %p102 = scmp.eq.s32.totalorder %s101, 0
      %s104 = sadd.s32 %s103, 1
      %s105 = scalar_select %p102, %s103, %s104
      %p108 = pneg %p102
      %p109 = scmp.eq.s32.totalorder %s15, 1
      %p110 = por %p108, %p109
      %p111 = scmp.ne.s32.totalorder %s103, %s106
      %p112 = scmp.eq.s32.totalorder %s15, 0
      %p113 = por %p111, %p112
      %p114 = scmp.ne.s32.totalorder %s103, %s106
      %p115 = scmp.eq.s32.totalorder %s20, 1
      %p116 = por %p114, %p115
      %p117 = scmp.ne.s32.totalorder %s106, %s107
      %p118 = scmp.eq.s32.totalorder %s20, 0
      %p119 = por %p117, %p118
      %p120 = scmp.ne.s32.totalorder %s106, %s107
      %p121 = scmp.eq.s32.totalorder %s21, 1
      %p122 = por %p120, %p121
      %p124 = scmp.ne.s32.totalorder %s107, %s123
      %p125 = scmp.eq.s32.totalorder %s21, 0
      %p126 = por %p124, %p125
      %p127 = scmp.le.s32.totalorder 1, %s15
      %p128 = scmp.lt.s32.totalorder %s15, 3
      %p129 = pnand %p127, %p128
      %p130 = pneg %p129
      // Predicated region
      $region9: #{tpu_custom_call.1} parent=5 // pred_check
        _
      $region10: #{tpu_custom_call.1} parent=5 // pred_check_branch
        %132 = sbr.rel (%p129) target = $region12
      $region11: #{tpu_custom_call.1} parent=5 // pred_region
        %s133 = ssub.s32 %s15, 1
      $region12: #{tpu_custom_call.1} parent=5 // pred_fallthru
        _
      %p134 = scmp.lt.s32.totalorder %s15, 2
      // Predicated region
      $region13: #{tpu_custom_call.1} parent=5 // pred_check
        %p135 = pneg %p134
      $region14: #{tpu_custom_call.1} parent=5 // pred_check_branch
        %137 = sbr.rel (%p135) target = $region16
      $region15: #{tpu_custom_call.1} parent=5 // pred_region
        // Predicated region
        $region17: #{tpu_custom_call.1} parent=15 // pred_check
          %p138 = pneg %p35
        $region18: #{tpu_custom_call.1} parent=15 // pred_check_branch
          %140 = sbr.rel (%p138) target = $region20
        $region19: #{tpu_custom_call.1} parent=15 // pred_region
          %s141 = smul.u32 9, %s15
          %p142 = scmp.lt.s32.totalorder %s141, 17
          %s143 = scalar_select %p142, %s141, 17
          %s144 = smul.addr %s143, 8
          %s145 = scalar_lea.vmem %s0, %s144
          %s146 = smul.u32 9, %s15
        $region20: #{tpu_custom_call.1} parent=15 // pred_fallthru
          _
        // Predicated region
        $region21: #{tpu_custom_call.1} parent=15 // pred_check
          %p147 = pneg %p61
        $region22: #{tpu_custom_call.1} parent=15 // pred_check_branch
          %149 = sbr.rel (%p147) target = $region24
        $region23: #{tpu_custom_call.1} parent=15 // pred_region
          %s150 = sand.u32 %s51, 1
          %s151 = scalar_lea.sflag [#allocation3], %s150
          %s152 = sand.u32 %s51, 1
          %s153 = smul.addr %s152, 72
          %s154 = scalar_lea.vmem [#allocation2], %s153
          %s155 = smul.u32 9, %s15
          %157 = vsyncadd %s151, 0
          %s158 = smul.addr %s155, 8
          %s159 = scalar_lea.hbm %s1, %s158
          %s160 = sshll.u32 %s159, 4
          %s161 = int_to_ptr.hbm [resolvable:$true] %s160
          %s162 = sshll.u32 %s154, 4
          %s163 = int_to_ptr.vmem [resolvable:$true] %s162
          %168 = dma.hbm_to_vmem [thread:$0]  %s161, 1152, %s163, %s151, 128, 128, 8
        $region24: #{tpu_custom_call.1} parent=15 // pred_fallthru
          _
        // Predicated region
        $region25: #{tpu_custom_call.1} parent=15 // pred_check
          %p169 = pneg %p87
        $region26: #{tpu_custom_call.1} parent=15 // pred_check_branch
          %171 = sbr.rel (%p169) target = $region28
        $region27: #{tpu_custom_call.1} parent=15 // pred_region
          %s172 = smul.u32 9, %s15
          %p173 = scmp.lt.s32.totalorder %s172, 17
          %s174 = scalar_select %p173, %s172, 17
          %s175 = smul.addr %s174, 8
          %s176 = scalar_lea.vmem %s2, %s175
          %s177 = smul.u32 9, %s15
        $region28: #{tpu_custom_call.1} parent=15 // pred_fallthru
          _
      $region16: #{tpu_custom_call.1} parent=5 // pred_fallthru
        _
      %p178 = scmp.le.s32.totalorder 1, %s15
      %p179 = scmp.lt.s32.totalorder %s15, 3
      %p180 = pnand %p178, %p179
      %p181 = pneg %p180
      // Predicated region
      $region29: #{tpu_custom_call.1} parent=5 // pred_check
        _
      $region30: #{tpu_custom_call.1} parent=5 // pred_check_branch
        %183 = sbr.rel (%p180) target = $region32
      $region31: #{tpu_custom_call.1} parent=5 // pred_region
        %s184 = ssub.s32 %s15, 1
        %s185 = sand.u32 %s54, 1
        %s186 = scalar_lea.sflag [#allocation3], %s185
        %s187 = sand.u32 %s54, 1
        %s188 = smul.addr %s187, 72
        %s189 = scalar_lea.vmem [#allocation2], %s188
        // Predicated region
        $region33: #{tpu_custom_call.1} parent=31 // pred_check
          %p190 = pneg %p67
        $region34: #{tpu_custom_call.1} parent=31 // pred_check_branch
          %192 = sbr.rel (%p190) target = $region36
        $region35: #{tpu_custom_call.1} parent=31 // pred_region
          %194 = dma.done %s186, 1152
        $region36: #{tpu_custom_call.1} parent=31 // pred_fallthru
          _
        %s195 = smul.u32 9, %s20
        %p196 = scmp.lt.s32.totalorder %s195, 17
        %s197 = scalar_select %p196, %s195, 17
        %s198 = smul.addr %s197, 8
        %s199 = scalar_lea.vmem %s0, %s198
        %p200 = pneg %p41
        %p201 = pneg %p38
        %s202 = sand.u32 %s54, 1
        %s203 = scalar_lea.sflag [#allocation3], %s202
        %s204 = sand.u32 %s54, 1
        %s205 = smul.addr %s204, 72
        %s206 = scalar_lea.vmem [#allocation2], %s205
        %p207 = pneg %p67
        %p208 = pneg %p64
        %s209 = smul.u32 9, %s20
        %p210 = scmp.lt.s32.totalorder %s209, 17
        %s211 = scalar_select %p210, %s209, 17
        %s212 = smul.addr %s211, 8
        %s213 = scalar_lea.vmem %s2, %s212
        %p214 = pneg %p93
        %p215 = pneg %p90
        %p216 = pneg %p119
        %p217 = pneg %p116
        %s218 = sand.u32 %s106, 1
        %s219 = scalar_lea.sflag [#allocation4], %s218
        %s220 = sand.u32 %s106, 1
        %s221 = smul.addr %s220, 2
        %s222 = scalar_lea.vmem [#allocation5], %s221
        %s223 = smul.u32 9, %s20
        %p224 = scmp.lt.s32.totalorder %s223, 17
        %s225 = scalar_select %p224, %s223, 17
        %s226 = smul.addr %s225, 8
        %s227 = scalar_lea.vmem %s0, %s226
        %s228 = smul.u32 9, %s20
        %s229 = smul.u32 9, %s20
        %s230 = smul.u32 9, %s20
        %p231 = scmp.lt.s32.totalorder %s230, 17
        %s232 = scalar_select %p231, %s230, 17
        %s233 = smul.addr %s232, 8
        %s234 = scalar_lea.vmem %s2, %s233
        %s235 = smul.u32 9, %s20
        %v236 = vld [vmem:[%s227] sm:$0xff]
        %v237 = vld [vmem:[%s227 + $0x8] sm:$0xff]
        %v238 = vld [vmem:[%s227 + $0x10] sm:$0xff]
        %v239 = vld [vmem:[%s227 + $0x18] sm:$0xff]
        %v240 = vld [vmem:[%s227 + $0x20] sm:$0xff]
        %v241 = vld [vmem:[%s227 + $0x28] sm:$0xff]
        %v242 = vld [vmem:[%s227 + $0x30] sm:$0xff]
        %v243 = vld [vmem:[%s227 + $0x38] sm:$0xff]
        %v244 = vld [vmem:[%s227 + $0x40] sm:$0xff]
        %v245 = vld [vmem:[%s189] sm:$0xff]
        %v246 = vld [vmem:[%s189 + $0x8] sm:$0xff]
        %v247 = vld [vmem:[%s189 + $0x10] sm:$0xff]
        %v248 = vld [vmem:[%s189 + $0x18] sm:$0xff]
        %v249 = vld [vmem:[%s189 + $0x20] sm:$0xff]
        %v250 = vld [vmem:[%s189 + $0x28] sm:$0xff]
        %v251 = vld [vmem:[%s189 + $0x30] sm:$0xff]
        %v252 = vld [vmem:[%s189 + $0x38] sm:$0xff]
        %v253 = vld [vmem:[%s189 + $0x40] sm:$0xff]
        %v254 = vld [vmem:[%s234] sm:$0xff]
        %v255 = vld [vmem:[%s234 + $0x8] sm:$0xff]
        %v256 = vld [vmem:[%s234 + $0x10] sm:$0xff]
        %v257 = vld [vmem:[%s234 + $0x18] sm:$0xff]
        %v258 = vld [vmem:[%s234 + $0x20] sm:$0xff]
        %v259 = vld [vmem:[%s234 + $0x28] sm:$0xff]
        %v260 = vld [vmem:[%s234 + $0x30] sm:$0xff]
        %v261 = vld [vmem:[%s234 + $0x38] sm:$0xff]
        %v262 = vld [vmem:[%s234 + $0x40] sm:$0xff]
        %v263 = vlaneseq
        %v264 = vand.u32 %v263, 127
        %v265 = vcvt.s32.f32 %v264
        %267 = vset.pattern.permute.xlu0 2
        %268 = vperm.xlu0 %267, %v254
        %v269 = vpop.permute.xlu0 %268
        %272 = vset.pattern.permute.xlu0 2
        %273 = vperm.xlu0 %272, %v255
        %v274 = vpop.permute.xlu0 %273
        %277 = vset.pattern.permute.xlu0 2
        %278 = vperm.xlu0 %277, %v256
        %v279 = vpop.permute.xlu0 %278
        %282 = vset.pattern.permute.xlu0 2
        %283 = vperm.xlu0 %282, %v257
        %v284 = vpop.permute.xlu0 %283
        %287 = vset.pattern.permute.xlu0 2
        %288 = vperm.xlu0 %287, %v258
        %v289 = vpop.permute.xlu0 %288
        %292 = vset.pattern.permute.xlu0 2
        %293 = vperm.xlu0 %292, %v259
        %v294 = vpop.permute.xlu0 %293
        %297 = vset.pattern.permute.xlu0 2
        %298 = vperm.xlu0 %297, %v260
        %v299 = vpop.permute.xlu0 %298
        %302 = vset.pattern.permute.xlu0 2
        %303 = vperm.xlu0 %302, %v261
        %v304 = vpop.permute.xlu0 %303
        %307 = vset.pattern.permute.xlu0 2
        %308 = vperm.xlu0 %307, %v262
        %v309 = vpop.permute.xlu0 %308
        %vm311 = vcmp.lt.f32.partialorder %v265, %v269
        %vm312 = vcmp.lt.f32.partialorder %v265, %v274
        %vm313 = vcmp.lt.f32.partialorder %v265, %v279
        %vm314 = vcmp.lt.f32.partialorder %v265, %v284
        %vm315 = vcmp.lt.f32.partialorder %v265, %v289
        %vm316 = vcmp.lt.f32.partialorder %v265, %v294
        %vm317 = vcmp.lt.f32.partialorder %v265, %v299
        %vm318 = vcmp.lt.f32.partialorder %v265, %v304
        %vm319 = vcmp.lt.f32.partialorder %v265, %v309
        %v320 = vsub.f32 %v236, 1.0
        %v321 = vsub.f32 %v237, 1.0
        %v322 = vsub.f32 %v238, 1.0
        %v323 = vsub.f32 %v239, 1.0
        %v324 = vsub.f32 %v240, 1.0
        %v325 = vsub.f32 %v241, 1.0
        %v326 = vsub.f32 %v242, 1.0
        %v327 = vsub.f32 %v243, 1.0
        %v328 = vsub.f32 %v244, 1.0
        %v329 = vmul.f32 %v320, %v320
        %v330 = vmul.f32 %v321, %v321
        %v331 = vmul.f32 %v322, %v322
        %v332 = vmul.f32 %v323, %v323
        %v333 = vmul.f32 %v324, %v324
        %v334 = vmul.f32 %v325, %v325
        %v335 = vmul.f32 %v326, %v326
        %v336 = vmul.f32 %v327, %v327
        %v337 = vmul.f32 %v328, %v328
        %v338 = vsel %vm311, %v329, 0.0
        %v339 = vsel %vm312, %v330, 0.0
        %v340 = vsel %vm313, %v331, 0.0
        %v341 = vsel %vm314, %v332, 0.0
        %v342 = vsel %vm315, %v333, 0.0
        %v343 = vsel %vm316, %v334, 0.0
        %v344 = vsel %vm317, %v335, 0.0
        %v345 = vsel %vm318, %v336, 0.0
        %v346 = vsel %vm319, %v337, 0.0
        %347 = vset.pattern.permute.xlu0 0
        %348 = vperm.xlu0 %347, %v254
        %v349 = vpop.permute.xlu0 %348
        %351 = vset.pattern.permute.xlu0 0
        %352 = vperm.xlu0 %351, %v255
        %v353 = vpop.permute.xlu0 %352
        %355 = vset.pattern.permute.xlu0 0
        %356 = vperm.xlu0 %355, %v256
        %v357 = vpop.permute.xlu0 %356
        %359 = vset.pattern.permute.xlu0 0
        %360 = vperm.xlu0 %359, %v257
        %v361 = vpop.permute.xlu0 %360
        %363 = vset.pattern.permute.xlu0 0
        %364 = vperm.xlu0 %363, %v258
        %v365 = vpop.permute.xlu0 %364
        %367 = vset.pattern.permute.xlu0 0
        %368 = vperm.xlu0 %367, %v259
        %v369 = vpop.permute.xlu0 %368
        %371 = vset.pattern.permute.xlu0 0
        %372 = vperm.xlu0 %371, %v260
        %v373 = vpop.permute.xlu0 %372
        %375 = vset.pattern.permute.xlu0 0
        %376 = vperm.xlu0 %375, %v261
        %v377 = vpop.permute.xlu0 %376
        %379 = vset.pattern.permute.xlu0 0
        %380 = vperm.xlu0 %379, %v262
        %v381 = vpop.permute.xlu0 %380
        %v383 = vmul.f32 %v349, %v338
        %v384 = vmul.f32 %v353, %v339
        %v385 = vmul.f32 %v357, %v340
        %v386 = vmul.f32 %v361, %v341
        %v387 = vmul.f32 %v365, %v342
        %v388 = vmul.f32 %v369, %v343
        %v389 = vmul.f32 %v373, %v344
        %v390 = vmul.f32 %v377, %v345
        %v391 = vmul.f32 %v381, %v346
        %v392 = vadd.f32 %v383, %v384
        %v393 = vadd.f32 %v392, %v385
        %v394 = vadd.f32 %v393, %v386
        %v395 = vadd.f32 %v394, %v387
        %v396 = vadd.f32 %v395, %v388
        %v397 = vadd.f32 %v396, %v389
        %v398 = vadd.f32 %v397, %v390
        %v399 = vadd.f32 %v398, %v391
        %v400 = vrot.slane %v399, 4
        %v401 = vadd.f32 %v399, %v400
        %v402 = vrot.slane %v401, 2
        %v403 = vadd.f32 %v401, %v402
        %v404 = vrot.slane %v403, 1
        %v405 = vadd.f32 %v403, %v404
        %v406 = vsub.f32 %v236, %v245
        %v407 = vsub.f32 %v237, %v246
        %v408 = vsub.f32 %v238, %v247
        %v409 = vsub.f32 %v239, %v248
        %v410 = vsub.f32 %v240, %v249
        %v411 = vsub.f32 %v241, %v250
        %v412 = vsub.f32 %v242, %v251
        %v413 = vsub.f32 %v243, %v252
        %v414 = vsub.f32 %v244, %v253
        %v415 = vand.u32 2147483647, %v406
        %v416 = vand.u32 2147483647, %v407
        %v417 = vand.u32 2147483647, %v408
        %v418 = vand.u32 2147483647, %v409
        %v419 = vand.u32 2147483647, %v410
        %v420 = vand.u32 2147483647, %v411
        %v421 = vand.u32 2147483647, %v412
        %v422 = vand.u32 2147483647, %v413
        %v423 = vand.u32 2147483647, %v414
        %424 = vset.pattern.permute.xlu0 1
        %425 = vperm.xlu0 %424, %v254
        %v426 = vpop.permute.xlu0 %425
        %428 = vset.pattern.permute.xlu0 1
        %429 = vperm.xlu0 %428, %v255
        %v430 = vpop.permute.xlu0 %429
        %432 = vset.pattern.permute.xlu0 1
        %433 = vperm.xlu0 %432, %v256
        %v434 = vpop.permute.xlu0 %433
        %436 = vset.pattern.permute.xlu0 1
        %437 = vperm.xlu0 %436, %v257
        %v438 = vpop.permute.xlu0 %437
        %440 = vset.pattern.permute.xlu0 1
        %441 = vperm.xlu0 %440, %v258
        %v442 = vpop.permute.xlu0 %441
        %444 = vset.pattern.permute.xlu0 1
        %445 = vperm.xlu0 %444, %v259
        %v446 = vpop.permute.xlu0 %445
        %448 = vset.pattern.permute.xlu0 1
        %449 = vperm.xlu0 %448, %v260
        %v450 = vpop.permute.xlu0 %449
        %452 = vset.pattern.permute.xlu0 1
        %453 = vperm.xlu0 %452, %v261
        %v454 = vpop.permute.xlu0 %453
        %456 = vset.pattern.permute.xlu0 1
        %457 = vperm.xlu0 %456, %v262
        %v458 = vpop.permute.xlu0 %457
        %v460 = vmul.f32 %v426, %v415
        %v461 = vmul.f32 %v430, %v416
        %v462 = vmul.f32 %v434, %v417
        %v463 = vmul.f32 %v438, %v418
        %v464 = vmul.f32 %v442, %v419
        %v465 = vmul.f32 %v446, %v420
        %v466 = vmul.f32 %v450, %v421
        %v467 = vmul.f32 %v454, %v422
        %v468 = vmul.f32 %v458, %v423
        %v469 = vadd.f32 %v460, %v461
        %v470 = vadd.f32 %v469, %v462
        %v471 = vadd.f32 %v470, %v463
        %v472 = vadd.f32 %v471, %v464
        %v473 = vadd.f32 %v472, %v465
        %v474 = vadd.f32 %v473, %v466
        %v475 = vadd.f32 %v474, %v467
        %v476 = vadd.f32 %v475, %v468
        %v477 = vrot.slane %v476, 4
        %v478 = vadd.f32 %v476, %v477
        %v479 = vrot.slane %v478, 2
        %v480 = vadd.f32 %v478, %v479
        %v481 = vrot.slane %v480, 1
        %v482 = vadd.f32 %v480, %v481
        %v485 = vrot.slane %v482, 7
        %vm486 = vcmask 1040384
        %v487 = vsel %vm486, %v405, %v485
        %v489 = vlaneseq
        %vm490 = vcmp.ge.s32.totalorder %v489, 0
        %vm491 = vcmp.lt.s32.totalorder %v489, 256
        %vm492 = vmand %vm490, %vm491
        %493 = vst.msk [vmem:[%s222] sm:$0x3] %vm492, %v487
        %s494 = sand.u32 %s106, 1
        %s495 = scalar_lea.sflag [#allocation4], %s494
        %s496 = sand.u32 %s106, 1
        %s497 = smul.addr %s496, 2
        %s498 = scalar_lea.vmem [#allocation5], %s497
        // Predicated region
        $region37: #{tpu_custom_call.1} parent=31 // pred_check
          %p499 = pneg %p116
        $region38: #{tpu_custom_call.1} parent=31 // pred_check_branch
          %501 = sbr.rel (%p499) target = $region40
        $region39: #{tpu_custom_call.1} parent=31 // pred_region
          %503 = vsyncadd %s495, 0
          %s504 = smul.addr %s20, 2
          %s505 = scalar_lea.hbm %s3, %s504
          %s507 = sshll.u32 %s498, 4
          %s508 = int_to_ptr.vmem [resolvable:$true] %s507
          %s509 = sshll.u32 %s505, 4
          %s510 = int_to_ptr.hbm [resolvable:$true] %s509
          %512 = dma.vmem_to_hbm [thread:$0]  %s508, 32, %s510, %s495
        $region40: #{tpu_custom_call.1} parent=31 // pred_fallthru
          _
      $region32: #{tpu_custom_call.1} parent=5 // pred_fallthru
        _
      %p513 = scmp.le.s32.totalorder 2, %s15
      // Predicated region
      $region41: #{tpu_custom_call.1} parent=5 // pred_check
        %p514 = pneg %p513
      $region42: #{tpu_custom_call.1} parent=5 // pred_check_branch
        %516 = sbr.rel (%p514) target = $region44
      $region43: #{tpu_custom_call.1} parent=5 // pred_region
        %s517 = ssub.s32 %s15, 2
        // Predicated region
        $region45: #{tpu_custom_call.1} parent=43 // pred_check
          %p518 = pneg %p122
        $region46: #{tpu_custom_call.1} parent=43 // pred_check_branch
          %520 = sbr.rel (%p518) target = $region48
        $region47: #{tpu_custom_call.1} parent=43 // pred_region
          %s521 = sand.u32 %s107, 1
          %s522 = scalar_lea.sflag [#allocation4], %s521
          %s523 = sand.u32 %s107, 1
          %s524 = smul.addr %s523, 2
          %s525 = scalar_lea.vmem [#allocation5], %s524
          %527 = dma.done %s522, 32
        $region48: #{tpu_custom_call.1} parent=43 // pred_fallthru
          _
      $region44: #{tpu_custom_call.1} parent=5 // pred_fallthru
        _
    $region6: #{tpu_custom_call.1} parent=1 // loop_footer
      %s19 = sadd.s32 1, %s15
    $region7: #{tpu_custom_call.1} parent=1 // loop_footer_branch
      %14 = sbr.rel target = $region3
    $region8: #{tpu_custom_call.1} parent=1 // loop_exit
      _
    %528 = vsyncpa [#allocation3], 1
    %s529 = scalar_lea.sflag [#allocation3], 1
    %530 = vsyncpa %s529, 1
    %531 = vsyncpa [#allocation4], 1
    %s532 = scalar_lea.sflag [#allocation4], 1
    %533 = vsyncpa %s532, 1

</llo_original>
